<compile_context>
chip_gen: v6e
topology: v6e:2x2x1
jax: 0.10.0
libtpu: 0.0.40
codegen_flags: <defaults>
</compile_context>

<pallas_src>
import functools

import jax
import jax.numpy as jnp
from jax.experimental import pallas as pl
from jax.experimental.pallas import tpu as pltpu

_LANES = 128
_SUBLANES = 8
_MAX_BLOCK_ROWS = 2048   # (2048, 128) f32 tile = 1 MiB per input buffer
_NUM_CORES = 2           # always split row-blocks across 2 TensorCores (v7x)


def _round_up(x: int, m: int) -> int:
    return ((x + m - 1) // m) * m


def _cdiv(a: int, b: int) -> int:
    return -(-a // b)


def _focal_loss_kernel(x_ref, t_ref, out_ref, *,
                       alpha: float, gamma: float, n: int, block_rows: int):
    c = pl.program_id(0)             # TensorCore split ("parallel")
    i = pl.program_id(1)             # row-block loop   ("arbitrary")
    nbpc = pl.num_programs(1)

    @pl.when(i == 0)
    def _():
        out_ref[...] = jnp.zeros_like(out_ref)

    x = x_ref[...].astype(jnp.float32)
    t = t_ref[...].astype(jnp.float32)

    # One shared exp(-|x|) feeds both sigmoid(x) and the stable BCE log1p term.
    e = jnp.exp(-jnp.abs(x))
    inv = pl.reciprocal(1.0 + e, approx=True)            # EUP vrcp, not a VALU divide
    p = jnp.where(x >= 0.0, inv, e * inv)                 # sigmoid(x)
    ce = jnp.maximum(x, 0.0) - x * t + jnp.log1p(e)       # BCE-with-logits, 'none'

    p_t = p * t + (1.0 - p) * (1.0 - t)
    one_m = 1.0 - p_t
    g = float(gamma)
    if g == 2.0:                                          # default: plain VPU square
        mod = one_m * one_m
    elif g == float(int(g)) and 0.0 <= g <= 4.0:          # small integer gammas
        mod = jnp.ones_like(one_m)
        for _ in range(int(g)):
            mod = mod * one_m
    else:                                                 # generic float exponent
        mod = one_m ** g
    loss = ce * mod
    if alpha >= 0:
        loss = (alpha * t + (1.0 - alpha) * (1.0 - t)) * loss

    def _tile_reduce(v):
        # (block_rows,128) -> (8,128): block_rows//8 - 1 vreg-aligned VALU adds,
        # no XLU, no large loop-carried accumulator.
        return jnp.sum(v.reshape(block_rows // _SUBLANES, _SUBLANES, _LANES), axis=0)

    row0 = (c * nbpc + i) * block_rows
    fully_valid = (row0 + block_rows) * _LANES <= n        # scalar

    @pl.when(fully_valid)                                  # interior tiles: no mask work
    def _():
        out_ref[...] += _tile_reduce(loss)[None, :, :]

    @pl.when(jnp.logical_not(fully_valid))                 # at most the boundary tile(s)
    def _():
        row_idx = row0 + jax.lax.broadcasted_iota(jnp.int32, (block_rows, _LANES), 0)
        lane_idx = jax.lax.broadcasted_iota(jnp.int32, (block_rows, _LANES), 1)
        valid = (row_idx * _LANES + lane_idx) < n
        # Select blocks NaN/Inf from garbage padded lanes; no upfront clamps needed.
        out_ref[...] += _tile_reduce(jnp.where(valid, loss, 0.0))[None, :, :]


def bf_with_logits_loss(inputs, targets, alpha: float = 0.25,
                        gamma: float = 2.0, reduction: str = "mean"):
    """JAX/Pallas equivalent of BFWithLogitsLoss.forward (sigmoid focal loss).

    Inputs may be f32/bf16/int8 etc.; they are streamed in their native dtype and
    cast to f32 in-VMEM (passing bf16 targets/logits halves HBM traffic on v5e/v6e).
    """
    assert inputs.shape == targets.shape
    if reduction == "none":
        # TODO(synk): 'none' needs an elementwise-output kernel; module default is 'mean'.
        raise NotImplementedError("reduction='none' not implemented")

    n = int(inputs.size)
    if n == 0:
        return jnp.float32(0.0) if reduction == "sum" else jnp.float32(float("nan"))

    x = jnp.ravel(inputs)
    t = jnp.ravel(targets)

    # Sublane alignment for the native dtypes (f32 -> 8, bf16 -> 16, int8/fp8 -> 32).
    row_align = max(_SUBLANES,
                    _SUBLANES * 4 // x.dtype.itemsize,
                    _SUBLANES * 4 // t.dtype.itemsize)

    rows = _cdiv(n, _LANES)
    # Always 2 cores; balance block count and block size across them.
    nbpc = _cdiv(rows, _NUM_CORES * _MAX_BLOCK_ROWS)                 # blocks per core
    block_rows = _round_up(_cdiv(rows, _NUM_CORES * nbpc), row_align)
    total_rows = _NUM_CORES * nbpc * block_rows

    # Pad only what is strictly required:
    #  * lane pad up to rows*128 (<= 127 elements) so the slab is (rows, 128);
    #  * pad further to total_rows only when the very last block would start past the
    #    end of the slab (tiny inputs); otherwise the ragged last block is handled by
    #    Pallas partial-block reads + the in-kernel boundary mask.
    last_block_start = (_NUM_CORES * nbpc - 1) * block_rows
    need_rows = total_rows if last_block_start >= rows else rows
    padded_len = need_rows * _LANES
    if padded_len != n:
        x = jnp.pad(x, (0, padded_len - n))
        t = jnp.pad(t, (0, padded_len - n))
    x2 = x.reshape(need_rows, _LANES)
    t2 = t.reshape(need_rows, _LANES)

    kernel = functools.partial(_focal_loss_kernel, alpha=float(alpha),
                               gamma=float(gamma), n=n, block_rows=block_rows)
    in_spec = pl.BlockSpec((block_rows, _LANES),
                           lambda c, i: (c * nbpc + i, 0))

    out = pl.pallas_call(
        kernel,
        out_shape=jax.ShapeDtypeStruct((_NUM_CORES, _SUBLANES, _LANES), jnp.float32),
        grid_spec=pltpu.PrefetchScalarGridSpec(
            num_scalar_prefetch=0,
            grid=(_NUM_CORES, nbpc),
            in_specs=[in_spec, in_spec],
            out_specs=pl.BlockSpec((1, _SUBLANES, _LANES), lambda c, i: (c, 0, 0)),
        ),
        compiler_params=pltpu.CompilerParams(
            dimension_semantics=("parallel", "arbitrary")),
        cost_estimate=pl.CostEstimate(
            flops=25 * n,
            transcendentals=3 * n,
            bytes_accessed=int(x2.nbytes + t2.nbytes
                               + _NUM_CORES * _SUBLANES * _LANES * 4)),
    )(x2, t2)

    total = jnp.sum(out)                    # sum of the two per-core (8,128) partials
    if reduction == "mean":
        return total / jnp.float32(n)
    return total                            # "sum"


def _reference(inputs, targets, alpha=0.25, gamma=2.0, reduction="mean"):
    x = inputs.astype(jnp.float32)
    t = targets.astype(jnp.float32)
    p = jax.nn.sigmoid(x)
    ce = jnp.maximum(x, 0.0) - x * t + jnp.log1p(jnp.exp(-jnp.abs(x)))
    p_t = p * t + (1 - p) * (1 - t)
    loss = ce * (1 - p_t) ** gamma
    if alpha >= 0:
        loss = (alpha * t + (1 - alpha) * (1 - t)) * loss
    return jnp.mean(loss) if reduction == "mean" else jnp.sum(loss)


if __name__ == "__main__":
    key = jax.random.PRNGKey(0)
    k1, k2, k3, k4 = jax.random.split(key, 4)

    # NCHW logits and binary targets (per-pixel binary classification head).
    shape = (2, 4, 16, 16)
    logits = jax.random.normal(k1, shape, dtype=jnp.float32)
    targets = (jax.random.uniform(k2, shape) > 0.5).astype(jnp.float32)

    loss_mean = bf_with_logits_loss(logits, targets, alpha=0.25, gamma=2.0,
                                    reduction="mean")
    loss_sum = bf_with_logits_loss(logits, targets, alpha=0.25, gamma=2.0,
                                   reduction="sum")

    # Ragged size: exercises the fast unmasked interior path AND the masked boundary
    # path (partial last block) in the same call.
    shape2 = (5, 300)
    logits2 = jax.random.normal(k3, shape2, dtype=jnp.float32)
    targets2 = (jax.random.uniform(k4, shape2) > 0.5).astype(jnp.float32)
    loss2 = bf_with_logits_loss(logits2, targets2, reduction="mean")

    # bf16 targets: native-dtype streaming (HBM-bytes lever); cast happens in-VMEM.
    loss_bf16 = bf_with_logits_loss(logits, targets.astype(jnp.bfloat16),
                                    reduction="mean")

    jax.block_until_ready((loss_mean, loss_sum, loss2, loss_bf16))

    ref_mean = _reference(logits, targets, reduction="mean")
    ref_sum = _reference(logits, targets, reduction="sum")
    ref2 = _reference(logits2, targets2, reduction="mean")

    # rtol loosened slightly because of the approx EUP reciprocal in sigmoid.
    assert jnp.allclose(loss_mean, ref_mean, rtol=2e-3, atol=1e-6), (loss_mean, ref_mean)
    assert jnp.allclose(loss_sum, ref_sum, rtol=2e-3, atol=1e-4), (loss_sum, ref_sum)
    assert jnp.allclose(loss2, ref2, rtol=2e-3, atol=1e-6), (loss2, ref2)
    assert jnp.allclose(loss_bf16, ref_mean, rtol=1e-2, atol=1e-4), (loss_bf16, ref_mean)
    print("KERNEL_OK")
</pallas_src>

<mosaic_0001>
module attributes {stable_mosaic.version = 11 : i64} {
  func.func @_focal_loss_kernel(%arg0: i32, %arg1: i32, %arg2: memref<8x128xf32, #tpu.memory_space<vmem>>, %arg3: memref<8x128xf32, #tpu.memory_space<vmem>>, %arg4: memref<1x8x128xf32, #tpu.memory_space<vmem>>) attributes {dimension_semantics = [#tpu.dimension_semantics<parallel>, #tpu.dimension_semantics<arbitrary>], iteration_bounds = array<i64: 2, 1>, scalar_prefetch = 0 : i64, scratch_operands = 0 : i64, tpu.core_type = #tpu.core_type<tc>, window_params = [{transform_indices = @transform_0, window_bounds = array<i64: 8, 128>}, {transform_indices = @transform_1, window_bounds = array<i64: 8, 128>}, {transform_indices = @transform_2, window_bounds = array<i64: 1, 8, 128>}]} {
    %c0_i32 = arith.constant 0 : i32
    %0 = arith.cmpi eq, %arg1, %c0_i32 : i32
    %1 = arith.extui %0 : i1 to i32
    %c0_i32_0 = arith.constant 0 : i32
    %2 = arith.cmpi ne, %1, %c0_i32_0 : i32
    scf.if %2 {
      %cst_16 = arith.constant 0.000000e+00 : f32
      %52 = vector.broadcast %cst_16 : f32 to vector<1x8x128xf32>
      %c0_17 = arith.constant 0 : index
      %c0_18 = arith.constant 0 : index
      %c0_19 = arith.constant 0 : index
      %53 = vector.load %arg4[%c0_17, %c0_18, %c0_19] : memref<1x8x128xf32, #tpu.memory_space<vmem>>, vector<1x8x128xf32>
      tpu.vector_store %arg4[%c0_17, %c0_18, %c0_19], %52 {strides = array<i32>} : memref<1x8x128xf32, #tpu.memory_space<vmem>>, vector<1x8x128xf32>,
    } else {
    }
    %c0 = arith.constant 0 : index
    %c0_1 = arith.constant 0 : index
    %3 = vector.load %arg2[%c0, %c0_1] : memref<8x128xf32, #tpu.memory_space<vmem>>, vector<8x128xf32>
    %c0_2 = arith.constant 0 : index
    %c0_3 = arith.constant 0 : index
    %4 = vector.load %arg3[%c0_2, %c0_3] : memref<8x128xf32, #tpu.memory_space<vmem>>, vector<8x128xf32>
    %5 = math.absf %3 : vector<8x128xf32>
    %cst = arith.constant 0.000000e+00 : f32
    %6 = vector.broadcast %cst : f32 to vector<8x128xf32>
    %7 = arith.subf %6, %5 : vector<8x128xf32>
    %8 = math.exp %7 : vector<8x128xf32>
    %cst_4 = arith.constant 1.000000e+00 : f32
    %9 = vector.broadcast %cst_4 : f32 to vector<8x128xf32>
    %10 = arith.addf %9, %8 : vector<8x128xf32>
    %11 = tpu.reciprocal %10 {approx = true} : vector<8x128xf32> -> vector<8x128xf32>
    %cst_5 = arith.constant 0.000000e+00 : f32
    %12 = vector.broadcast %cst_5 : f32 to vector<8x128xf32>
    %13 = arith.cmpf oge, %3, %12 : vector<8x128xf32>
    %14 = arith.mulf %8, %11 : vector<8x128xf32>
    %15 = arith.select %13, %11, %14 : vector<8x128xi1>, vector<8x128xf32>
    %cst_6 = arith.constant 0.000000e+00 : f32
    %16 = vector.broadcast %cst_6 : f32 to vector<8x128xf32>
    %17 = arith.maximumf %3, %16 : vector<8x128xf32>
    %18 = arith.mulf %3, %4 : vector<8x128xf32>
    %19 = arith.subf %17, %18 : vector<8x128xf32>
    %20 = math.log1p %8 : vector<8x128xf32>
    %21 = arith.addf %19, %20 : vector<8x128xf32>
    %22 = arith.mulf %15, %4 : vector<8x128xf32>
    %cst_7 = arith.constant 1.000000e+00 : f32
    %23 = vector.broadcast %cst_7 : f32 to vector<8x128xf32>
    %24 = arith.subf %23, %15 : vector<8x128xf32>
    %cst_8 = arith.constant 1.000000e+00 : f32
    %25 = vector.broadcast %cst_8 : f32 to vector<8x128xf32>
    %26 = arith.subf %25, %4 : vector<8x128xf32>
    %27 = arith.mulf %24, %26 : vector<8x128xf32>
    %28 = arith.addf %22, %27 : vector<8x128xf32>
    %cst_9 = arith.constant 1.000000e+00 : f32
    %29 = vector.broadcast %cst_9 : f32 to vector<8x128xf32>
    %30 = arith.subf %29, %28 : vector<8x128xf32>
    %31 = arith.mulf %30, %30 : vector<8x128xf32>
    %32 = arith.mulf %21, %31 : vector<8x128xf32>
    %cst_10 = arith.constant 2.500000e-01 : f32
    %33 = vector.broadcast %cst_10 : f32 to vector<8x128xf32>
    %34 = arith.mulf %33, %4 : vector<8x128xf32>
    %cst_11 = arith.constant 1.000000e+00 : f32
    %35 = vector.broadcast %cst_11 : f32 to vector<8x128xf32>
    %36 = arith.subf %35, %4 : vector<8x128xf32>
    %cst_12 = arith.constant 7.500000e-01 : f32
    %37 = vector.broadcast %cst_12 : f32 to vector<8x128xf32>
    %38 = arith.mulf %37, %36 : vector<8x128xf32>
    %39 = arith.addf %34, %38 : vector<8x128xf32>
    %40 = arith.mulf %39, %32 : vector<8x128xf32>
    %c1_i32 = arith.constant 1 : i32
    %41 = arith.muli %arg0, %c1_i32 : i32
    %42 = arith.addi %41, %arg1 : i32
    %c8_i32 = arith.constant 8 : i32
    %43 = arith.muli %42, %c8_i32 : i32
    %c8_i32_13 = arith.constant 8 : i32
    %44 = arith.addi %43, %c8_i32_13 : i32
    %c128_i32 = arith.constant 128 : i32
    %45 = arith.muli %44, %c128_i32 : i32
    %c2048_i32 = arith.constant 2048 : i32
    %46 = arith.cmpi sle, %45, %c2048_i32 : i32
    %47 = arith.extui %46 : i1 to i32
    %c0_i32_14 = arith.constant 0 : i32
    %48 = arith.cmpi ne, %47, %c0_i32_14 : i32
    scf.if %48 {
      %c0_16 = arith.constant 0 : index
      %c0_17 = arith.constant 0 : index
      %c0_18 = arith.constant 0 : index
      %52 = vector.load %arg4[%c0_16, %c0_17, %c0_18] : memref<1x8x128xf32, #tpu.memory_space<vmem>>, vector<1x8x128xf32>
      %53 = vector.shape_cast %40 : vector<8x128xf32> to vector<1x8x128xf32>
      %cst_19 = arith.constant dense<0.000000e+00> : vector<8x128xf32>
      %54 = vector.multi_reduction <add>, %53, %cst_19 [0] : vector<1x8x128xf32> to vector<8x128xf32>
      %55 = vector.shape_cast %54 : vector<8x128xf32> to vector<1x8x128xf32>
      %56 = arith.addf %52, %55 : vector<1x8x128xf32>
      %c0_20 = arith.constant 0 : index
      %c0_21 = arith.constant 0 : index
      %c0_22 = arith.constant 0 : index
      %57 = vector.load %arg4[%c0_20, %c0_21, %c0_22] : memref<1x8x128xf32, #tpu.memory_space<vmem>>, vector<1x8x128xf32>
      tpu.vector_store %arg4[%c0_20, %c0_21, %c0_22], %56 {strides = array<i32>} : memref<1x8x128xf32, #tpu.memory_space<vmem>>, vector<1x8x128xf32>,
    } else {
    }
    %true = arith.constant true
    %49 = arith.xori %46, %true : i1
    %50 = arith.extui %49 : i1 to i32
    %c0_i32_15 = arith.constant 0 : i32
    %51 = arith.cmpi ne, %50, %c0_i32_15 : i32
    scf.if %51 {
      %52 = tpu.iota {dimensions = array<i32: 0>} : vector<8x128xi32>
      %53 = vector.broadcast %43 : i32 to vector<8x128xi32>
      %54 = arith.addi %53, %52 : vector<8x128xi32>
      %55 = tpu.iota {dimensions = array<i32: 1>} : vector<8x128xi32>
      %c128_i32_16 = arith.constant 128 : i32
      %56 = vector.broadcast %c128_i32_16 : i32 to vector<8x128xi32>
      %57 = arith.muli %54, %56 : vector<8x128xi32>
      %58 = arith.addi %57, %55 : vector<8x128xi32>
      %c2048_i32_17 = arith.constant 2048 : i32
      %59 = vector.broadcast %c2048_i32_17 : i32 to vector<8x128xi32>
      %60 = arith.cmpi slt, %58, %59 : vector<8x128xi32>
      %c0_18 = arith.constant 0 : index
      %c0_19 = arith.constant 0 : index
      %c0_20 = arith.constant 0 : index
      %61 = vector.load %arg4[%c0_18, %c0_19, %c0_20] : memref<1x8x128xf32, #tpu.memory_space<vmem>>, vector<1x8x128xf32>
      %cst_21 = arith.constant 0.000000e+00 : f32
      %62 = vector.broadcast %cst_21 : f32 to vector<8x128xf32>
      %63 = arith.select %60, %40, %62 : vector<8x128xi1>, vector<8x128xf32>
      %64 = vector.shape_cast %63 : vector<8x128xf32> to vector<1x8x128xf32>
      %cst_22 = arith.constant dense<0.000000e+00> : vector<8x128xf32>
      %65 = vector.multi_reduction <add>, %64, %cst_22 [0] : vector<1x8x128xf32> to vector<8x128xf32>
      %66 = vector.shape_cast %65 : vector<8x128xf32> to vector<1x8x128xf32>
      %67 = arith.addf %61, %66 : vector<1x8x128xf32>
      %c0_23 = arith.constant 0 : index
      %c0_24 = arith.constant 0 : index
      %c0_25 = arith.constant 0 : index
      %68 = vector.load %arg4[%c0_23, %c0_24, %c0_25] : memref<1x8x128xf32, #tpu.memory_space<vmem>>, vector<1x8x128xf32>
      tpu.vector_store %arg4[%c0_23, %c0_24, %c0_25], %67 {strides = array<i32>} : memref<1x8x128xf32, #tpu.memory_space<vmem>>, vector<1x8x128xf32>,
    } else {
    }
    return
  }
  func.func @transform_0(%arg0: i32, %arg1: i32) -> (i32, i32) {
    %c1_i32 = arith.constant 1 : i32
    %0 = arith.muli %arg0, %c1_i32 : i32
    %1 = arith.addi %0, %arg1 : i32
    %c0_i32 = arith.constant 0 : i32
    %c0_i32_0 = arith.constant 0 : i32
    return %1, %c0_i32 : i32, i32
  }
  func.func @transform_1(%arg0: i32, %arg1: i32) -> (i32, i32) {
    %c1_i32 = arith.constant 1 : i32
    %0 = arith.muli %arg0, %c1_i32 : i32
    %1 = arith.addi %0, %arg1 : i32
    %c0_i32 = arith.constant 0 : i32
    %c0_i32_0 = arith.constant 0 : i32
    return %1, %c0_i32 : i32, i32
  }
  func.func @transform_2(%arg0: i32, %arg1: i32) -> (i32, i32, i32) {
    %c0_i32 = arith.constant 0 : i32
    %c0_i32_0 = arith.constant 0 : i32
    %c0_i32_1 = arith.constant 0 : i32
    return %arg0, %c0_i32, %c0_i32_0 : i32, i32, i32
  }
}

</mosaic_0001>

<llo_original>
// kernel: tpu_custom_call.1
$region0: #{tpu_custom_call.1}
  #allocation0 [shape = 'u32[]', space=smem, size = 0x4, offset = 0x4, fixed_abs, tag = 'smem constant byte address 0x4 - core index']
  #allocation1 [shape = 'u32[144,128]{1,0:T(1,128)}', space=vmem, size = 0x12000, scoped, tag = 'internal scratch']
  %s0 = inlined_call_operand.hbm [shape: f32[16,128], index: 0, kind: input, shape index: {}]
  %s1 = inlined_call_operand.hbm [shape: f32[16,128], index: 1, kind: input, shape index: {}]
  %s2 = inlined_call_operand.hbm [shape: f32[2,8,128], index: 2, kind: output, shape index: {}]
  %s3 = sld [smem:[#allocation0]]
  $region61: #{tpu_custom_call.1} parent=0
    _
  %s5 = ssub.s32 1, %s3
  %s6 = scalar_select 0, %s5, %s3
  $region1: #{tpu_custom_call.1} parent=0
    #allocation2 [shape = 'u8[8192]{0}', space=vmem, size = 0x2000, scoped, tag = 'input window, operand 0']
    #allocation3 [shape = 's32[2]{0}', space=sflag, size = 0x8, scoped, tag = 'scoped memory for tpu_custom_call.1']
    #allocation4 [shape = 's32[2]{0}', space=sflag, size = 0x8, scoped, tag = 'scoped memory for tpu_custom_call.1']
    #allocation5 [shape = 'u8[8192]{0}', space=vmem, size = 0x2000, scoped, tag = 'input window, operand 1']
    #allocation6 [shape = 's32[2]{0}', space=sflag, size = 0x8, scoped, tag = 'scoped memory for tpu_custom_call.1']
    #allocation7 [shape = 'u8[8192]{0}', space=vmem, size = 0x2000, scoped, tag = 'output window, operand 0']
    %7 = vsyncpa [#allocation3], 0
    %s8 = scalar_lea.sflag [#allocation3], 1
    %9 = vsyncpa %s8, 0
    %10 = vsyncpa [#allocation6], 0
    %s11 = scalar_lea.sflag [#allocation6], 1
    %12 = vsyncpa %s11, 0
    %13 = vsyncpa [#allocation4], 0
    %s14 = scalar_lea.sflag [#allocation4], 1
    %15 = vsyncpa %s14, 0
    loop: start=0, step=1, limit=4
    $region2: #{tpu_custom_call.1} parent=1 // loop_pre_header
      _
    $region3: #{tpu_custom_call.1} parent=1 // loop_header
      %s17 = sphi 0, %s21
      %p18 = scmp.ge.s32.totalorder %s17, 4
      %s24 = sphi 0, %s36
      %s25 = sphi 0, %s32
      %s26 = sphi 0, %s24
      %s27 = sphi 0, %s25
      %s28 = sphi 0, %s26
      %s29 = sphi 0, %s27
      %s41 = sphi 0, %s43
      %s44 = sphi 0, %s41
      %s45 = sphi 0, %s44
      %s61 = sphi 0, %s45
      %s69 = sphi 0, %s71
      %s72 = sphi 0, %s69
      %s73 = sphi 0, %s72
      %s89 = sphi 0, %s73
      %s95 = sphi 0, %s97
      %s98 = sphi 0, %s95
      %s99 = sphi 0, %s98
      %s115 = sphi 0, %s99
    $region4: #{tpu_custom_call.1} parent=1 // loop_header_branch
      %20 = sbr.rel (%p18) target = $region8
    $region5: #{tpu_custom_call.1} parent=1 // loop_body
      %s22 = ssub.s32 %s17, 1
      %s23 = ssub.s32 %s17, 2
      %s30 = sadd.s32 1, %s25
      %p31 = scmp.ge.s32.totalorder %s30, 1
      %s32 = scalar_select %p31, 0, %s30
      %s33 = sadd.s32 1, %s24
      %s34 = scalar_select %p31, %s33, %s24
      %p35 = scmp.ge.s32.totalorder %s34, 2
      %s36 = scalar_select %p35, 0, %s34
      %s37 = sadd.s32 %s24, %s25
      %s38 = sadd.s32 %s36, %s32
      %s39 = ssub.s32 %s37, %s38
      %p40 = scmp.eq.s32.totalorder %s39, 0
      %s42 = sadd.s32 %s41, 1
      %s43 = scalar_select %p40, %s41, %s42
      %p46 = pneg %p40
      %p47 = scmp.eq.s32.totalorder %s17, 1
      %p48 = por %p46, %p47
      %p49 = scmp.ne.s32.totalorder %s41, %s44
      %p50 = scmp.eq.s32.totalorder %s17, 0
      %p51 = por %p49, %p50
      %p52 = scmp.ne.s32.totalorder %s41, %s44
      %p53 = scmp.eq.s32.totalorder %s22, 1
      %p54 = por %p52, %p53
      %p55 = scmp.ne.s32.totalorder %s44, %s45
      %p56 = scmp.eq.s32.totalorder %s22, 0
      %p57 = por %p55, %p56
      %p58 = scmp.ne.s32.totalorder %s44, %s45
      %p59 = scmp.eq.s32.totalorder %s23, 1
      %p60 = por %p58, %p59
      %p62 = scmp.ne.s32.totalorder %s45, %s61
      %p63 = scmp.eq.s32.totalorder %s23, 0
      %p64 = por %p62, %p63
      %s65 = sadd.s32 %s24, %s25
      %s66 = sadd.s32 %s36, %s32
      %s67 = ssub.s32 %s65, %s66
      %p68 = scmp.eq.s32.totalorder %s67, 0
      %s70 = sadd.s32 %s69, 1
      %s71 = scalar_select %p68, %s69, %s70
      %p74 = pneg %p68
      %p75 = scmp.eq.s32.totalorder %s17, 1
      %p76 = por %p74, %p75
      %p77 = scmp.ne.s32.totalorder %s69, %s72
      %p78 = scmp.eq.s32.totalorder %s17, 0
      %p79 = por %p77, %p78
      %p80 = scmp.ne.s32.totalorder %s69, %s72
      %p81 = scmp.eq.s32.totalorder %s22, 1
      %p82 = por %p80, %p81
      %p83 = scmp.ne.s32.totalorder %s72, %s73
      %p84 = scmp.eq.s32.totalorder %s22, 0
      %p85 = por %p83, %p84
      %p86 = scmp.ne.s32.totalorder %s72, %s73
      %p87 = scmp.eq.s32.totalorder %s23, 1
      %p88 = por %p86, %p87
      %p90 = scmp.ne.s32.totalorder %s73, %s89
      %p91 = scmp.eq.s32.totalorder %s23, 0
      %p92 = por %p90, %p91
      %s93 = ssub.s32 %s24, %s36
      %p94 = scmp.eq.s32.totalorder %s93, 0
      %s96 = sadd.s32 %s95, 1
      %s97 = scalar_select %p94, %s95, %s96
      %p100 = pneg %p94
      %p101 = scmp.eq.s32.totalorder %s17, 1
      %p102 = por %p100, %p101
      %p103 = scmp.ne.s32.totalorder %s95, %s98
      %p104 = scmp.eq.s32.totalorder %s17, 0
      %p105 = por %p103, %p104
      %p106 = scmp.ne.s32.totalorder %s95, %s98
      %p107 = scmp.eq.s32.totalorder %s22, 1
      %p108 = por %p106, %p107
      %p109 = scmp.ne.s32.totalorder %s98, %s99
      %p110 = scmp.eq.s32.totalorder %s22, 0
      %p111 = por %p109, %p110
      %p112 = scmp.ne.s32.totalorder %s98, %s99
      %p113 = scmp.eq.s32.totalorder %s23, 1
      %p114 = por %p112, %p113
      %p116 = scmp.ne.s32.totalorder %s99, %s115
      %p117 = scmp.eq.s32.totalorder %s23, 0
      %p118 = por %p116, %p117
      %p119 = scmp.le.s32.totalorder 1, %s17
      %p120 = scmp.lt.s32.totalorder %s17, 3
      %p121 = pnand %p119, %p120
      %p122 = pneg %p121
      // Predicated region
      $region9: #{tpu_custom_call.1} parent=5 // pred_check
        _
      $region10: #{tpu_custom_call.1} parent=5 // pred_check_branch
        %124 = sbr.rel (%p121) target = $region12
      $region11: #{tpu_custom_call.1} parent=5 // pred_region
        %s125 = ssub.s32 %s17, 1
      $region12: #{tpu_custom_call.1} parent=5 // pred_fallthru
        _
      %p126 = scmp.lt.s32.totalorder %s17, 2
      // Predicated region
      $region13: #{tpu_custom_call.1} parent=5 // pred_check
        %p127 = pneg %p126
      $region14: #{tpu_custom_call.1} parent=5 // pred_check_branch
        %129 = sbr.rel (%p127) target = $region16
      $region15: #{tpu_custom_call.1} parent=5 // pred_region
        // Predicated region
        $region17: #{tpu_custom_call.1} parent=15 // pred_check
          %p130 = pneg %p51
        $region18: #{tpu_custom_call.1} parent=15 // pred_check_branch
          %132 = sbr.rel (%p130) target = $region20
        $region19: #{tpu_custom_call.1} parent=15 // pred_region
          %s133 = sand.u32 %s41, 1
          %s134 = scalar_lea.sflag [#allocation3], %s133
          %s135 = sand.u32 %s41, 1
          %s136 = smul.addr %s135, 8
          %s137 = scalar_lea.vmem [#allocation2], %s136
          %s138 = sadd.s32 %s24, %s25
          %s140 = ssub.s32 128, 128
          %141 = vsyncadd %s134, %s140
          %s142 = smul.addr %s138, 128
          %s143 = scalar_lea.hbm %s0, %s142
          %s145 = sshll.u32 %s137, 4
          %s146 = int_to_ptr.vmem [resolvable:$true] %s145
          %148 = dma.hbm_to_vmem [thread:$0]  %s143, 128, %s146, %s134
        $region20: #{tpu_custom_call.1} parent=15 // pred_fallthru
          _
        // Predicated region
        $region21: #{tpu_custom_call.1} parent=15 // pred_check
          %p149 = pneg %p79
        $region22: #{tpu_custom_call.1} parent=15 // pred_check_branch
          %151 = sbr.rel (%p149) target = $region24
        $region23: #{tpu_custom_call.1} parent=15 // pred_region
          %s152 = sand.u32 %s69, 1
          %s153 = scalar_lea.sflag [#allocation6], %s152
          %s154 = sand.u32 %s69, 1
          %s155 = smul.addr %s154, 8
          %s156 = scalar_lea.vmem [#allocation5], %s155
          %s157 = sadd.s32 %s24, %s25
          %s159 = ssub.s32 128, 128
          %160 = vsyncadd %s153, %s159
          %s161 = smul.addr %s157, 128
          %s162 = scalar_lea.hbm %s1, %s161
          %s164 = sshll.u32 %s156, 4
          %s165 = int_to_ptr.vmem [resolvable:$true] %s164
          %167 = dma.hbm_to_vmem [thread:$0]  %s162, 128, %s165, %s153
        $region24: #{tpu_custom_call.1} parent=15 // pred_fallthru
          _
      $region16: #{tpu_custom_call.1} parent=5 // pred_fallthru
        _
      %p168 = scmp.le.s32.totalorder 1, %s17
      %p169 = scmp.lt.s32.totalorder %s17, 3
      %p170 = pnand %p168, %p169
      %p171 = pneg %p170
      // Predicated region
      $region25: #{tpu_custom_call.1} parent=5 // pred_check
        _
      $region26: #{tpu_custom_call.1} parent=5 // pred_check_branch
        %173 = sbr.rel (%p170) target = $region28
      $region27: #{tpu_custom_call.1} parent=5 // pred_region
        %s174 = ssub.s32 %s17, 1
        %s175 = sand.u32 %s44, 1
        %s176 = scalar_lea.sflag [#allocation3], %s175
        %s177 = sand.u32 %s44, 1
        %s178 = smul.addr %s177, 8
        %s179 = scalar_lea.vmem [#allocation2], %s178
        // Predicated region
        $region29: #{tpu_custom_call.1} parent=27 // pred_check
          %p180 = pneg %p57
        $region30: #{tpu_custom_call.1} parent=27 // pred_check_branch
          %182 = sbr.rel (%p180) target = $region32
        $region31: #{tpu_custom_call.1} parent=27 // pred_region
          %183 = dma.done %s176, 128
        $region32: #{tpu_custom_call.1} parent=27 // pred_fallthru
          _
        %s184 = sand.u32 %s72, 1
        %s185 = scalar_lea.sflag [#allocation6], %s184
        %s186 = sand.u32 %s72, 1
        %s187 = smul.addr %s186, 8
        %s188 = scalar_lea.vmem [#allocation5], %s187
        // Predicated region
        $region33: #{tpu_custom_call.1} parent=27 // pred_check
          %p189 = pneg %p85
        $region34: #{tpu_custom_call.1} parent=27 // pred_check_branch
          %191 = sbr.rel (%p189) target = $region36
        $region35: #{tpu_custom_call.1} parent=27 // pred_region
          %192 = dma.done %s185, 128
        $region36: #{tpu_custom_call.1} parent=27 // pred_fallthru
          _
        %s193 = sand.u32 %s44, 1
        %s194 = scalar_lea.sflag [#allocation3], %s193
        %s195 = sand.u32 %s44, 1
        %s196 = smul.addr %s195, 8
        %s197 = scalar_lea.vmem [#allocation2], %s196
        %p198 = pneg %p57
        %p199 = pneg %p54
        %s200 = sand.u32 %s72, 1
        %s201 = scalar_lea.sflag [#allocation6], %s200
        %s202 = sand.u32 %s72, 1
        %s203 = smul.addr %s202, 8
        %s204 = scalar_lea.vmem [#allocation5], %s203
        %p205 = pneg %p85
        %p206 = pneg %p82
        %p207 = pneg %p111
        %p208 = pneg %p108
        %s209 = sand.u32 %s98, 1
        %s210 = scalar_lea.sflag [#allocation4], %s209
        %s211 = sand.u32 %s98, 1
        %s212 = smul.addr %s211, 8
        %s213 = scalar_lea.vmem [#allocation7], %s212
        %s214 = sadd.s32 %s26, %s27
        %s215 = sadd.s32 %s26, %s27
        %p216 = scmp.eq.s32.totalorder %s27, 0
        // Predicated region
        $region37: #{tpu_custom_call.1} parent=27 // pred_check
          %p217 = pneg %p216
        $region38: #{tpu_custom_call.1} parent=27 // pred_check_branch
          %219 = sbr.rel (%p217) target = $region40
        $region39: #{tpu_custom_call.1} parent=27 // pred_region
          %220 = vst [vmem:[%s213] sm:$0xff] 0.0
        $region40: #{tpu_custom_call.1} parent=27 // pred_fallthru
          _
        %v221 = vld [vmem:[%s179] sm:$0xff]
        %v222 = vld [vmem:[%s188] sm:$0xff]
        %v223 = vand.u32 2147483647, %v221
        %v224 = vsub.f32 0.0, %v223
        %v225 = vmul.f32 %v224, 1.442695
        %v226 = vpow.pop %v225
        %v227 = vadd.f32 %v226, 1.0
        %v228 = vrcp.pop %v227
        %vm229 = vcmp.ge.f32.partialorder %v221, 0.0
        %v230 = vmul.f32 %v226, %v228
        %v231 = vsel %vm229, %v228, %v230
        %v232 = vmax.f32 %v221, 0.0
        %v233 = vmul.f32 %v221, %v222
        %v234 = vsub.f32 %v232, %v233
        %v235 = vadd.f32 %v226, 1.0
        %v236 = vlog2.pop %v235
        %v237 = vmul.f32 %v236, 0.6931472
        %v238 = vmul.f32 -0.5, %v226
        %v239 = vadd.f32 %v238, 1.0
        %v240 = vmul.f32 %v239, %v226
        %v241 = vand.u32 2147483647, %v226
        %vm242 = vcmp.lt.f32.partialorder %v241, 0.0004427343
        %v243 = vsel %vm242, %v240, %v237
        %v244 = vadd.f32 %v234, %v243
        %v245 = vmul.f32 %v231, %v222
        %v246 = vsub.f32 1.0, %v231
        %v247 = vsub.f32 1.0, %v222
        %v248 = vmul.f32 %v246, %v247
        %v249 = vadd.f32 %v245, %v248
        %v250 = vsub.f32 1.0, %v249
        %v251 = vmul.f32 %v250, %v250
        %v252 = vmul.f32 %v244, %v251
        %v253 = vmul.f32 %v222, 0.25
        %v254 = vmul.f32 %v247, 0.75
        %v255 = vadd.f32 %v253, %v254
        %v256 = vmul.f32 %v255, %v252
        %s257 = sadd.s32 %s26, %s27
        %s258 = smul.u32 %s257, 8
        %s259 = sadd.s32 %s258, 8
        %s260 = smul.u32 %s259, 128
        %p261 = scmp.le.s32.totalorder %s260, 2048
        // Predicated region
        $region41: #{tpu_custom_call.1} parent=27 // pred_check
          %p262 = pneg %p261
        $region42: #{tpu_custom_call.1} parent=27 // pred_check_branch
          %264 = sbr.rel (%p262) target = $region44
        $region43: #{tpu_custom_call.1} parent=27 // pred_region
          %v265 = vld [vmem:[%s213] sm:$0xff]
          %v266 = vadd.f32 %v256, 0.0
          %v267 = vadd.f32 %v265, %v266
          %268 = vst [vmem:[%s213] sm:$0xff] %v267
        $region44: #{tpu_custom_call.1} parent=27 // pred_fallthru
          _
        %p269 = scmp.gt.s32.totalorder %s260, 2048
        // Predicated region
        $region45: #{tpu_custom_call.1} parent=27 // pred_check
          %p270 = pneg %p269
        $region46: #{tpu_custom_call.1} parent=27 // pred_check_branch
          %272 = sbr.rel (%p270) target = $region48
        $region47: #{tpu_custom_call.1} parent=27 // pred_region
          %v273 = vlaneseq
          %v274 = vshrl.u32 %v273, 7
          %v275 = vstv %s258
          %v276 = vadd.s32 %v275, %v274
          %v277 = vlaneseq
          %v278 = vand.u32 %v277, 127
          %v279 = vmul.u32 %v276, 128
          %v280 = vadd.s32 %v279, %v278
          %vm281 = vcmp.lt.s32.totalorder %v280, 2048
          %v282 = vld [vmem:[%s213] sm:$0xff]
          %v283 = vsel %vm281, %v256, 0.0
          %v284 = vadd.f32 %v283, 0.0
          %v285 = vadd.f32 %v282, %v284
          %286 = vst [vmem:[%s213] sm:$0xff] %v285
        $region48: #{tpu_custom_call.1} parent=27 // pred_fallthru
          _
        %s287 = sand.u32 %s98, 1
        %s288 = scalar_lea.sflag [#allocation4], %s287
        %s289 = sand.u32 %s98, 1
        %s290 = smul.addr %s289, 8
        %s291 = scalar_lea.vmem [#allocation7], %s290
        // Predicated region
        $region49: #{tpu_custom_call.1} parent=27 // pred_check
          %p292 = pneg %p108
        $region50: #{tpu_custom_call.1} parent=27 // pred_check_branch
          %294 = sbr.rel (%p292) target = $region52
        $region51: #{tpu_custom_call.1} parent=27 // pred_region
          %s296 = ssub.s32 128, 128
          %297 = vsyncadd %s288, %s296
          %s298 = smul.addr %s26, 128
          %s299 = scalar_lea.hbm %s2, %s298
          %s301 = sshll.u32 %s291, 4
          %s302 = int_to_ptr.vmem [resolvable:$true] %s301
          %304 = dma.vmem_to_hbm [thread:$0]  %s302, 128, %s299, %s288
        $region52: #{tpu_custom_call.1} parent=27 // pred_fallthru
          _
      $region28: #{tpu_custom_call.1} parent=5 // pred_fallthru
        _
      %p305 = scmp.le.s32.totalorder 2, %s17
      // Predicated region
      $region53: #{tpu_custom_call.1} parent=5 // pred_check
        %p306 = pneg %p305
      $region54: #{tpu_custom_call.1} parent=5 // pred_check_branch
        %308 = sbr.rel (%p306) target = $region56
      $region55: #{tpu_custom_call.1} parent=5 // pred_region
        %s309 = ssub.s32 %s17, 2
        // Predicated region
        $region57: #{tpu_custom_call.1} parent=55 // pred_check
          %p310 = pneg %p114
        $region58: #{tpu_custom_call.1} parent=55 // pred_check_branch
          %312 = sbr.rel (%p310) target = $region60
        $region59: #{tpu_custom_call.1} parent=55 // pred_region
          %s313 = sand.u32 %s99, 1
          %s314 = scalar_lea.sflag [#allocation4], %s313
          %s315 = sand.u32 %s99, 1
          %s316 = smul.addr %s315, 8
          %s317 = scalar_lea.vmem [#allocation7], %s316
          %318 = dma.done %s314, 128
        $region60: #{tpu_custom_call.1} parent=55 // pred_fallthru
          _
      $region56: #{tpu_custom_call.1} parent=5 // pred_fallthru
        _
    $region6: #{tpu_custom_call.1} parent=1 // loop_footer
      %s21 = sadd.s32 1, %s17
    $region7: #{tpu_custom_call.1} parent=1 // loop_footer_branch
      %16 = sbr.rel target = $region3
    $region8: #{tpu_custom_call.1} parent=1 // loop_exit
      _
    %319 = vsyncpa [#allocation3], 1
    %s320 = scalar_lea.sflag [#allocation3], 1
    %321 = vsyncpa %s320, 1
    %322 = vsyncpa [#allocation6], 1
    %s323 = scalar_lea.sflag [#allocation6], 1
    %324 = vsyncpa %s323, 1
    %325 = vsyncpa [#allocation4], 1
    %s326 = scalar_lea.sflag [#allocation4], 1
    %327 = vsyncpa %s326, 1

</llo_original>
